<compile_context>
chip_gen: v7x
topology: tpu7x:2x2x1
jax: 0.10.0
libtpu: 0.0.40
codegen_flags: <defaults>
</compile_context>

<pallas_src>
import functools

import jax
import jax.numpy as jnp
from jax import lax
from jax.experimental import pallas as pl
from jax.experimental.pallas import tpu as pltpu

EPS = 1e-6


def _bilinear_resize_nchw(x, out_h, out_w):
  """Matches F.interpolate(mode='bilinear', align_corners=False), no antialias."""
  _, _, H, W = x.shape

  def src_idx(out_size, in_size):
    s = (jnp.arange(out_size, dtype=jnp.float32) + 0.5) * (in_size / out_size) - 0.5
    s = jnp.maximum(s, 0.0)
    i0 = jnp.floor(s).astype(jnp.int32)
    i1 = jnp.minimum(i0 + 1, in_size - 1)
    w1 = s - i0.astype(jnp.float32)
    return i0, i1, w1

  y0, y1, wy = src_idx(out_h, H)
  x0, x1, wx = src_idx(out_w, W)
  top = (x[:, :, y0, :] * (1.0 - wy)[None, None, :, None]
         + x[:, :, y1, :] * wy[None, None, :, None])
  out = top[:, :, :, x0] * (1.0 - wx) + top[:, :, :, x1] * wx
  return out


def _hist_kernel(x_ref, off_ref, o_ref, acc_ref, *, h, chunk, inv_sigma, n_valid):
  """Grid = (L, num_splits, chunks_per_split).

  x_ref:   (1, 3, chunk)   clamped RGB pixels, channel-major (pixels on lanes)
  off_ref: (h, 1)          linspace(-3, 3, h) / sigma (offsets on sublanes)
  o_ref:   (1, 1, 2h, 2h)  packed Gram for (image l, split s), lane-dense store
  acc_ref: (2h, 2h) f32    VMEM accumulator
  """
  s = pl.program_id(1)
  n = pl.program_id(2)

  @pl.when(n == 0)
  def _init():
    acc_ref[...] = jnp.zeros_like(acc_ref)

  x = x_ref[0]                                       # (3, chunk), already in [0,1]
  r, g, b = x[0:1, :], x[1:2, :], x[2:3, :]          # (1, chunk) each

  # Padded pixels are NOT inert (log(eps) gives a finite uv), so zero their
  # intensity weight Iy.  Masking the LHS alone is sufficient: the unmasked
  # RHS responses only ever multiply those zeros in the Gram.
  gchunk = s * pl.num_programs(2) + n
  col = lax.broadcasted_iota(jnp.int32, (1, chunk), 1) + gchunk * chunk
  valid = col < n_valid

  iy = jnp.sqrt(r * r + g * g + b * b + EPS)         # (1, chunk)
  iy = jnp.where(valid, iy, 0.0)

  lr = jnp.log(r + EPS)
  lg = jnp.log(g + EPS)
  lb = jnp.log(b + EPS)
  # 1/sigma folded into the offsets (host) and into d on the small (1, chunk)
  # shapes, so the (h, chunk) elementwise chain never multiplies by it.
  d_rg = (lr - lg) * inv_sigma                       # u of channel 0
  d_rb = (lr - lb) * inv_sigma                       # v of channel 0
  d_gb = (lg - lb) * inv_sigma                       # v of channel 1

  offs = off_ref[...]                                # (h, 1), pre-scaled by 1/sigma

  def resp(d):                                       # (1, chunk) -> (h, chunk)
    t = d - offs
    return pl.reciprocal(t * t + 1.0, approx=True)   # EUP slot, |t|^2 == t^2

  # Three unique response maps, each computed exactly once.
  k_rg = resp(d_rg)
  k_rb = resp(d_rb)
  k_gb = resp(d_gb)

  # Packed operands (offsets on sublanes, pixels on lanes).  bf16 operands cut
  # MXU push count and operand footprint; accumulation stays f32.
  lhs = jnp.concatenate([iy * k_rg, iy * k_rb], axis=0).astype(jnp.bfloat16)
  rhs = jnp.concatenate([k_rb, k_gb], axis=0).astype(jnp.bfloat16)

  # Contract over the pixel (lane) axis -> (2h, 2h) packed Gram matrix:
  #   p[0:h, 0:h]     = (Iy*k_rg) k_rb^T  -> hist channel 0
  #   p[0:h, h:2h]    = (Iy*k_rg) k_gb^T  -> flipud      -> hist channel 1
  #   p[h:2h, h:2h]   = (Iy*k_rb) k_gb^T  -> flipud+lr   -> hist channel 2
  acc_ref[...] += lax.dot_general(
      lhs, rhs, (((1,), (1,)), ((), ())),
      preferred_element_type=jnp.float32)

  @pl.when(n == pl.num_programs(2) - 1)
  def _store():
    o_ref[0, 0] = acc_ref[...]


def rgb_uv_hist_block(x, h=64, insz=150, sigma=0.02, pixel_chunk=4096,
                      num_splits=2):
  """Forward pass of RGBuvHistBlock. x: NCHW float array -> (N, 3, h, h)."""
  assert (2 * h) % 8 == 0, "h must keep 2*h a multiple of 8 (default 64 is fine)"
  x = jnp.clip(x.astype(jnp.float32), 0.0, 1.0)
  if x.shape[2] > insz or x.shape[3] > insz:
    x = _bilinear_resize_nchw(x, insz, insz)
  if x.shape[1] > 3:
    x = x[:, :3, :, :]

  L, _, Hs, Ws = x.shape
  N = Hs * Ws
  # Channel-major pixel layout (pixels on the lane axis in the kernel).
  xi = x.reshape(L, 3, N)

  # Chunk the pixel axis in lane-aligned (multiple-of-128) pieces; the chunk
  # range is then split across `num_splits` parallel grid slots so v7x's two
  # TensorCores are busy even for L == 1.
  n128 = ((N + 127) // 128) * 128
  chunk = min(int(pixel_chunk), n128)
  chunk = ((chunk + 127) // 128) * 128
  num_chunks = -(-n128 // chunk)
  num_splits = max(1, min(int(num_splits), num_chunks))
  chunks_per_split = -(-num_chunks // num_splits)
  num_chunks = chunks_per_split * num_splits
  n_pad = num_chunks * chunk
  if n_pad > N:
    xi = jnp.pad(xi, ((0, 0), (0, 0), (0, n_pad - N)))

  inv_sigma = 1.0 / float(sigma)
  offs = (jnp.linspace(-3.0, 3.0, h, dtype=jnp.float32) * inv_sigma).reshape(h, 1)

  kernel = functools.partial(_hist_kernel, h=h, chunk=chunk,
                             inv_sigma=inv_sigma, n_valid=N)
  gram = pl.pallas_call(
      kernel,
      out_shape=jax.ShapeDtypeStruct((L, num_splits, 2 * h, 2 * h), jnp.float32),
      grid_spec=pltpu.PrefetchScalarGridSpec(
          num_scalar_prefetch=0,
          grid=(L, num_splits, chunks_per_split),
          in_specs=[
              pl.BlockSpec((1, 3, chunk),
                           lambda l, s, n: (l, 0, s * chunks_per_split + n)),
              pl.BlockSpec((h, 1), lambda l, s, n: (0, 0)),
          ],
          out_specs=pl.BlockSpec((1, 1, 2 * h, 2 * h),
                                 lambda l, s, n: (l, s, 0, 0)),
          scratch_shapes=[pltpu.VMEM((2 * h, 2 * h), jnp.float32)],
      ),
      compiler_params=pltpu.CompilerParams(
          dimension_semantics=("parallel", "parallel", "arbitrary"),
          vmem_limit_bytes=32 * 1024 * 1024),
  )(xi, offs)

  # JAX epilogue: sum splits, unpack the Gram, apply the symmetry flips
  # (k(-d, off_i) = k(d, off_{h-1-i})), normalize (matches the PyTorch forward).
  p = gram.sum(axis=1)                                   # (L, 2h, 2h)
  h0 = p[:, 0:h, 0:h]
  h1 = jnp.flip(p[:, 0:h, h:2 * h], axis=1)              # flipud
  h2 = jnp.flip(p[:, h:2 * h, h:2 * h], axis=(1, 2))     # flipud + fliplr
  hists = jnp.stack([h0, h1, h2], axis=1)                # (L, 3, h, h)
  denom = hists.sum(axis=(1, 2, 3)).reshape(-1, 1, 1, 1) + EPS
  return hists / denom


def _reference_jax(x, h=64, insz=150, sigma=0.02):
  """Pure-JAX reference mirroring the PyTorch forward, for validation."""
  x = jnp.clip(x.astype(jnp.float32), 0.0, 1.0)
  if x.shape[2] > insz or x.shape[3] > insz:
    x = _bilinear_resize_nchw(x, insz, insz)
  if x.shape[1] > 3:
    x = x[:, :3, :, :]
  L = x.shape[0]
  offset = jnp.linspace(-3.0, 3.0, h, dtype=jnp.float32)[None, :]
  hists = []
  for l in range(L):
    I = x[l].reshape(3, -1).T                                    # (N, 3)
    Iy = jnp.sqrt(jnp.sum(I * I, axis=1, keepdims=True) + EPS)
    logI = jnp.log(I + EPS)
    chans = []
    pairs = [(0, 1, 2), (1, 0, 2), (2, 0, 1)]
    for c, a_i, b_i in pairs:
      Iu = (logI[:, c] - logI[:, a_i])[:, None]
      Iv = (logI[:, c] - logI[:, b_i])[:, None]
      du = 1.0 / (1.0 + (jnp.abs(Iu - offset) ** 2) / sigma ** 2)
      dv = 1.0 / (1.0 + (jnp.abs(Iv - offset) ** 2) / sigma ** 2)
      chans.append((Iy * du).T @ dv)
    hists.append(jnp.stack(chans, axis=0))
  hists = jnp.stack(hists, axis=0)
  denom = hists.sum(axis=(1, 2, 3)).reshape(-1, 1, 1, 1) + EPS
  return hists / denom


if __name__ == "__main__":
  key = jax.random.PRNGKey(0)
  k1, k2 = jax.random.split(key)

  # bf16 matmul operands + approx reciprocal consume some tolerance; the f32
  # reference is compared with a slightly relaxed (but still bug-catching) rtol.
  RTOL, ATOL = 1.5e-2, 1e-5

  # batch=2, channels=4 (exercises the >3-channel slice), spatial=16x16.
  x = jax.random.uniform(k1, (2, 4, 16, 16), dtype=jnp.float32,
                         minval=-0.2, maxval=1.2)
  out = jax.block_until_ready(rgb_uv_hist_block(x, h=64, insz=150, sigma=0.02))
  ref = _reference_jax(x, h=64, insz=150, sigma=0.02)
  assert out.shape == (2, 3, 64, 64)
  assert jnp.allclose(out, ref, rtol=RTOL, atol=ATOL), "mismatch (small input)"

  # Exercises the bilinear-resize path, the pixel-axis chunking / pad mask and
  # the 2-way split of the reduction (150*150 = 22500 px -> 6 chunks of 4096,
  # split 3+3 across the parallel axis, 2076 masked pad pixels).
  x2 = jax.random.uniform(k2, (1, 3, 160, 160), dtype=jnp.float32,
                          minval=-0.2, maxval=1.2)
  out2 = jax.block_until_ready(rgb_uv_hist_block(x2, h=64, insz=150, sigma=0.02))
  ref2 = _reference_jax(x2, h=64, insz=150, sigma=0.02)
  assert out2.shape == (1, 3, 64, 64)
  assert jnp.allclose(out2, ref2, rtol=RTOL, atol=ATOL), "mismatch (resize+chunk)"

  print("KERNEL_OK")
</pallas_src>

<mosaic_0001>
module attributes {stable_mosaic.version = 11 : i64} {
  func.func @_hist_kernel(%arg0: i32, %arg1: i32, %arg2: i32, %arg3: memref<1x3x256xf32, #tpu.memory_space<vmem>>, %arg4: memref<64x1xf32, #tpu.memory_space<vmem>>, %arg5: memref<1x1x128x128xf32, #tpu.memory_space<vmem>>, %arg6: memref<128x128xf32, #tpu.memory_space<vmem>>) attributes {dimension_semantics = [#tpu.dimension_semantics<parallel>, #tpu.dimension_semantics<parallel>, #tpu.dimension_semantics<arbitrary>], iteration_bounds = array<i64: 2, 1, 1>, scalar_prefetch = 0 : i64, scratch_operands = 1 : i64, tpu.core_type = #tpu.core_type<tc>, window_params = [{transform_indices = @transform_0, window_bounds = array<i64: 1, 3, 256>}, {pipeline_mode = #tpu.pipeline_mode<synchronous>, transform_indices = @transform_1, window_bounds = array<i64: 64, 1>}, {transform_indices = @transform_2, window_bounds = array<i64: 1, 1, 128, 128>}]} {
    %c0_i32 = arith.constant 0 : i32
    %0 = arith.cmpi eq, %arg2, %c0_i32 : i32
    %1 = arith.extui %0 : i1 to i32
    %c0_i32_0 = arith.constant 0 : i32
    %2 = arith.cmpi ne, %1, %c0_i32_0 : i32
    scf.if %2 {
      %cst_23 = arith.constant 0.000000e+00 : f32
      %81 = vector.broadcast %cst_23 : f32 to vector<128x128xf32>
      %c0_24 = arith.constant 0 : index
      %c0_25 = arith.constant 0 : index
      %82 = vector.load %arg6[%c0_24, %c0_25] : memref<128x128xf32, #tpu.memory_space<vmem>>, vector<128x128xf32>
      tpu.vector_store %arg6[%c0_24, %c0_25], %81 {strides = array<i32>} : memref<128x128xf32, #tpu.memory_space<vmem>>, vector<128x128xf32>,
    } else {
    }
    %c0 = arith.constant 0 : index
    %c0_1 = arith.constant 0 : index
    %c0_2 = arith.constant 0 : index
    %3 = vector.load %arg3[%c0, %c0_1, %c0_2] : memref<1x3x256xf32, #tpu.memory_space<vmem>>, vector<1x3x256xf32>
    %4 = vector.shape_cast %3 : vector<1x3x256xf32> to vector<3x256xf32>
    %5 = vector.extract_strided_slice %4 {offsets = [0, 0], sizes = [1, 256], strides = [1, 1]} : vector<3x256xf32> to vector<1x256xf32>
    %6 = vector.extract_strided_slice %4 {offsets = [1, 0], sizes = [1, 256], strides = [1, 1]} : vector<3x256xf32> to vector<1x256xf32>
    %7 = vector.extract_strided_slice %4 {offsets = [2, 0], sizes = [1, 256], strides = [1, 1]} : vector<3x256xf32> to vector<1x256xf32>
    %c1_i32 = arith.constant 1 : i32
    %8 = arith.muli %arg1, %c1_i32 : i32
    %9 = arith.addi %8, %arg2 : i32
    %10 = tpu.iota {dimensions = array<i32: 1>} : vector<1x256xi32>
    %c256_i32 = arith.constant 256 : i32
    %11 = arith.muli %9, %c256_i32 : i32
    %12 = vector.broadcast %11 : i32 to vector<1x256xi32>
    %13 = arith.addi %10, %12 : vector<1x256xi32>
    %c256_i32_3 = arith.constant 256 : i32
    %14 = vector.broadcast %c256_i32_3 : i32 to vector<1x256xi32>
    %15 = arith.cmpi slt, %13, %14 : vector<1x256xi32>
    %16 = arith.mulf %5, %5 : vector<1x256xf32>
    %17 = arith.mulf %6, %6 : vector<1x256xf32>
    %18 = arith.addf %16, %17 : vector<1x256xf32>
    %19 = arith.mulf %7, %7 : vector<1x256xf32>
    %20 = arith.addf %18, %19 : vector<1x256xf32>
    %cst = arith.constant 9.99999997E-7 : f32
    %21 = vector.broadcast %cst : f32 to vector<1x256xf32>
    %22 = arith.addf %20, %21 : vector<1x256xf32>
    %23 = math.sqrt %22 : vector<1x256xf32>
    %cst_4 = arith.constant 0.000000e+00 : f32
    %24 = vector.broadcast %cst_4 : f32 to vector<1x256xf32>
    %25 = arith.select %15, %23, %24 : vector<1x256xi1>, vector<1x256xf32>
    %cst_5 = arith.constant 9.99999997E-7 : f32
    %26 = vector.broadcast %cst_5 : f32 to vector<1x256xf32>
    %27 = arith.addf %5, %26 : vector<1x256xf32>
    %28 = math.log %27 : vector<1x256xf32>
    %cst_6 = arith.constant 9.99999997E-7 : f32
    %29 = vector.broadcast %cst_6 : f32 to vector<1x256xf32>
    %30 = arith.addf %6, %29 : vector<1x256xf32>
    %31 = math.log %30 : vector<1x256xf32>
    %cst_7 = arith.constant 9.99999997E-7 : f32
    %32 = vector.broadcast %cst_7 : f32 to vector<1x256xf32>
    %33 = arith.addf %7, %32 : vector<1x256xf32>
    %34 = math.log %33 : vector<1x256xf32>
    %35 = arith.subf %28, %31 : vector<1x256xf32>
    %cst_8 = arith.constant 5.000000e+01 : f32
    %36 = vector.broadcast %cst_8 : f32 to vector<1x256xf32>
    %37 = arith.mulf %35, %36 : vector<1x256xf32>
    %38 = arith.subf %28, %34 : vector<1x256xf32>
    %cst_9 = arith.constant 5.000000e+01 : f32
    %39 = vector.broadcast %cst_9 : f32 to vector<1x256xf32>
    %40 = arith.mulf %38, %39 : vector<1x256xf32>
    %41 = arith.subf %31, %34 : vector<1x256xf32>
    %cst_10 = arith.constant 5.000000e+01 : f32
    %42 = vector.broadcast %cst_10 : f32 to vector<1x256xf32>
    %43 = arith.mulf %41, %42 : vector<1x256xf32>
    %c0_11 = arith.constant 0 : index
    %c0_12 = arith.constant 0 : index
    %44 = vector.load %arg4[%c0_11, %c0_12] : memref<64x1xf32, #tpu.memory_space<vmem>>, vector<64x1xf32>
    %45 = vector.broadcast %37 : vector<1x256xf32> to vector<64x256xf32>
    %46 = vector.broadcast %44 : vector<64x1xf32> to vector<64x256xf32>
    %47 = arith.subf %45, %46 : vector<64x256xf32>
    %48 = arith.mulf %47, %47 : vector<64x256xf32>
    %cst_13 = arith.constant 1.000000e+00 : f32
    %49 = vector.broadcast %cst_13 : f32 to vector<64x256xf32>
    %50 = arith.addf %48, %49 : vector<64x256xf32>
    %51 = tpu.reciprocal %50 {approx = true} : vector<64x256xf32> -> vector<64x256xf32>
    %52 = vector.broadcast %40 : vector<1x256xf32> to vector<64x256xf32>
    %53 = vector.broadcast %44 : vector<64x1xf32> to vector<64x256xf32>
    %54 = arith.subf %52, %53 : vector<64x256xf32>
    %55 = arith.mulf %54, %54 : vector<64x256xf32>
    %cst_14 = arith.constant 1.000000e+00 : f32
    %56 = vector.broadcast %cst_14 : f32 to vector<64x256xf32>
    %57 = arith.addf %55, %56 : vector<64x256xf32>
    %58 = tpu.reciprocal %57 {approx = true} : vector<64x256xf32> -> vector<64x256xf32>
    %59 = vector.broadcast %43 : vector<1x256xf32> to vector<64x256xf32>
    %60 = vector.broadcast %44 : vector<64x1xf32> to vector<64x256xf32>
    %61 = arith.subf %59, %60 : vector<64x256xf32>
    %62 = arith.mulf %61, %61 : vector<64x256xf32>
    %cst_15 = arith.constant 1.000000e+00 : f32
    %63 = vector.broadcast %cst_15 : f32 to vector<64x256xf32>
    %64 = arith.addf %62, %63 : vector<64x256xf32>
    %65 = tpu.reciprocal %64 {approx = true} : vector<64x256xf32> -> vector<64x256xf32>
    %66 = vector.broadcast %25 : vector<1x256xf32> to vector<64x256xf32>
    %67 = arith.mulf %66, %51 : vector<64x256xf32>
    %68 = vector.broadcast %25 : vector<1x256xf32> to vector<64x256xf32>
    %69 = arith.mulf %68, %58 : vector<64x256xf32>
    %70 = tpu.concatenate %67, %69 in 0 : vector<64x256xf32>, vector<64x256xf32> -> vector<128x256xf32>
    %71 = arith.truncf %70 : vector<128x256xf32> to vector<128x256xbf16>
    %72 = tpu.concatenate %58, %65 in 0 : vector<64x256xf32>, vector<64x256xf32> -> vector<128x256xf32>
    %73 = arith.truncf %72 : vector<128x256xf32> to vector<128x256xbf16>
    %c0_16 = arith.constant 0 : index
    %c0_17 = arith.constant 0 : index
    %74 = vector.load %arg6[%c0_16, %c0_17] : memref<128x128xf32, #tpu.memory_space<vmem>>, vector<128x128xf32>
    %cst_18 = arith.constant dense<0.000000e+00> : vector<128x128xf32>
    %75 = tpu.matmul %71, %73, %cst_18 {dimension_numbers = #tpu.dot_dimension_numbers<[1], [1], [0], [0], [0, 0, 1, 0], [], []>} : vector<128x256xbf16>, vector<128x256xbf16>, vector<128x128xf32> -> vector<128x128xf32>
    %76 = arith.addf %74, %75 : vector<128x128xf32>
    %c0_19 = arith.constant 0 : index
    %c0_20 = arith.constant 0 : index
    %77 = vector.load %arg6[%c0_19, %c0_20] : memref<128x128xf32, #tpu.memory_space<vmem>>, vector<128x128xf32>
    tpu.vector_store %arg6[%c0_19, %c0_20], %76 {strides = array<i32>} : memref<128x128xf32, #tpu.memory_space<vmem>>, vector<128x128xf32>,
    %c0_i32_21 = arith.constant 0 : i32
    %78 = arith.cmpi eq, %arg2, %c0_i32_21 : i32
    %79 = arith.extui %78 : i1 to i32
    %c0_i32_22 = arith.constant 0 : i32
    %80 = arith.cmpi ne, %79, %c0_i32_22 : i32
    scf.if %80 {
      %c0_23 = arith.constant 0 : index
      %c0_24 = arith.constant 0 : index
      %81 = vector.load %arg6[%c0_23, %c0_24] : memref<128x128xf32, #tpu.memory_space<vmem>>, vector<128x128xf32>
      %c0_25 = arith.constant 0 : index
      %c0_26 = arith.constant 0 : index
      %c0_27 = arith.constant 0 : index
      %c0_28 = arith.constant 0 : index
      %82 = vector.load %arg5[%c0_25, %c0_26, %c0_27, %c0_28] : memref<1x1x128x128xf32, #tpu.memory_space<vmem>>, vector<1x1x128x128xf32>
      %83 = vector.shape_cast %82 : vector<1x1x128x128xf32> to vector<128x128xf32>
      %84 = vector.shape_cast %81 : vector<128x128xf32> to vector<1x1x128x128xf32>
      tpu.vector_store %arg5[%c0_25, %c0_26, %c0_27, %c0_28], %84 {strides = array<i32>} : memref<1x1x128x128xf32, #tpu.memory_space<vmem>>, vector<1x1x128x128xf32>,
    } else {
    }
    return
  }
  func.func @transform_0(%arg0: i32, %arg1: i32, %arg2: i32) -> (i32, i32, i32) {
    %c1_i32 = arith.constant 1 : i32
    %0 = arith.muli %arg1, %c1_i32 : i32
    %1 = arith.addi %0, %arg2 : i32
    %c0_i32 = arith.constant 0 : i32
    %c0_i32_0 = arith.constant 0 : i32
    return %arg0, %c0_i32, %1 : i32, i32, i32
  }
  func.func @transform_1(%arg0: i32, %arg1: i32, %arg2: i32) -> (i32, i32) {
    %c0_i32 = arith.constant 0 : i32
    %c0_i32_0 = arith.constant 0 : i32
    %c0_i32_1 = arith.constant 0 : i32
    return %c0_i32, %c0_i32_0 : i32, i32
  }
  func.func @transform_2(%arg0: i32, %arg1: i32, %arg2: i32) -> (i32, i32, i32, i32) {
    %c0_i32 = arith.constant 0 : i32
    %c0_i32_0 = arith.constant 0 : i32
    %c0_i32_1 = arith.constant 0 : i32
    return %arg0, %arg1, %c0_i32, %c0_i32_0 : i32, i32, i32, i32
  }
}

</mosaic_0001>

<llo_original>
// kernel: tpu_custom_call.1
$region0: #{tpu_custom_call.1}
  #allocation0 [shape = 'u32[]', space=smem, size = 0x4, offset = 0x4, fixed_abs, tag = 'smem constant byte address 0x4 - core index']
  #allocation1 [shape = 'u32[144,128]{1,0:T(1,128)}', space=vmem, size = 0x12000, scoped, tag = 'internal scratch']
  #allocation2 [shape = 'f32[128,128]{1,0:T(8,128)}', space=vmem, size = 0x10000, scoped, tag = 'scratch operand']
  %s0 = inlined_call_operand.vmem [shape: f32[2,3,256], index: 0, kind: input, shape index: {}]
  %s1 = inlined_call_operand.vmem [shape: f32[64,1], index: 1, kind: input, shape index: {}]
  %s2 = inlined_call_operand.hbm [shape: f32[2,1,128,128], index: 2, kind: output, shape index: {}]
  %s3 = sld [smem:[#allocation0]]
  $region49: #{tpu_custom_call.1} parent=0
    _
  %s5 = ssub.s32 1, %s3
  %s6 = scalar_select 0, %s5, %s3
  $region1: #{tpu_custom_call.1} parent=0
    #allocation3 [shape = 'u8[131072]{0}', space=vmem, size = 0x20000, scoped, tag = 'output window, operand 0']
    #allocation4 [shape = 's32[2]{0}', space=sflag, size = 0x8, scoped, tag = 'scoped memory for tpu_custom_call.1']
    %7 = vsyncpa [#allocation4], 0
    %s8 = scalar_lea.sflag [#allocation4], 1
    %9 = vsyncpa %s8, 0
    loop: start=0, step=1, limit=4
    $region2: #{tpu_custom_call.1} parent=1 // loop_pre_header
      _
    $region3: #{tpu_custom_call.1} parent=1 // loop_header
      %s11 = sphi 0, %s15
      %p12 = scmp.ge.s32.totalorder %s11, 4
      %s18 = sphi 0, %s37
      %s19 = sphi 0, %s33
      %s20 = sphi 0, %s29
      %s21 = sphi 0, %s18
      %s22 = sphi 0, %s19
      %s23 = sphi 0, %s20
      %s24 = sphi 0, %s21
      %s25 = sphi 0, %s22
      %s26 = sphi 0, %s23
      %s44 = sphi 0, %s46
      %s47 = sphi 0, %s44
      %s48 = sphi 0, %s47
      %s64 = sphi 0, %s48
      %s68 = sphi 0, %s68
      %s70 = sphi 0, %s68
      %s71 = sphi 0, %s70
      %s85 = sphi 0, %s71
      %s93 = sphi 0, %s95
      %s96 = sphi 0, %s93
      %s97 = sphi 0, %s96
      %s113 = sphi 0, %s97
    $region4: #{tpu_custom_call.1} parent=1 // loop_header_branch
      %14 = sbr.rel (%p12) target = $region8
    $region5: #{tpu_custom_call.1} parent=1 // loop_body
      %s16 = ssub.s32 %s11, 1
      %s17 = ssub.s32 %s11, 2
      %s27 = sadd.s32 1, %s20
      %p28 = scmp.ge.s32.totalorder %s27, 1
      %s29 = scalar_select %p28, 0, %s27
      %s30 = sadd.s32 1, %s19
      %s31 = scalar_select %p28, %s30, %s19
      %p32 = scmp.ge.s32.totalorder %s31, 1
      %s33 = scalar_select %p32, 0, %s31
      %s34 = sadd.s32 1, %s18
      %s35 = scalar_select %p32, %s34, %s18
      %p36 = scmp.ge.s32.totalorder %s35, 2
      %s37 = scalar_select %p36, 0, %s35
      %s38 = sadd.s32 %s19, %s20
      %s39 = sadd.s32 %s33, %s29
      %s40 = ssub.s32 %s18, %s37
      %s41 = ssub.s32 %s38, %s39
      %s42 = sor.u32 %s40, %s41
      %p43 = scmp.eq.s32.totalorder %s42, 0
      %s45 = sadd.s32 %s44, 1
      %s46 = scalar_select %p43, %s44, %s45
      %p49 = pneg %p43
      %p50 = scmp.eq.s32.totalorder %s11, 1
      %p51 = por %p49, %p50
      %p52 = scmp.ne.s32.totalorder %s44, %s47
      %p53 = scmp.eq.s32.totalorder %s11, 0
      %p54 = por %p52, %p53
      %p55 = scmp.ne.s32.totalorder %s44, %s47
      %p56 = scmp.eq.s32.totalorder %s16, 1
      %p57 = por %p55, %p56
      %p58 = scmp.ne.s32.totalorder %s47, %s48
      %p59 = scmp.eq.s32.totalorder %s16, 0
      %p60 = por %p58, %p59
      %p61 = scmp.ne.s32.totalorder %s47, %s48
      %p62 = scmp.eq.s32.totalorder %s17, 1
      %p63 = por %p61, %p62
      %p65 = scmp.ne.s32.totalorder %s48, %s64
      %p66 = scmp.eq.s32.totalorder %s17, 0
      %p67 = por %p65, %p66
      %s69 = sadd.s32 %s68, 1
      %p72 = scmp.eq.s32.totalorder %s11, 1
      %p73 = scmp.ne.s32.totalorder %s68, %s70
      %p74 = scmp.eq.s32.totalorder %s11, 0
      %p75 = por %p73, %p74
      %p76 = scmp.ne.s32.totalorder %s68, %s70
      %p77 = scmp.eq.s32.totalorder %s16, 1
      %p78 = por %p76, %p77
      %p79 = scmp.ne.s32.totalorder %s70, %s71
      %p80 = scmp.eq.s32.totalorder %s16, 0
      %p81 = por %p79, %p80
      %p82 = scmp.ne.s32.totalorder %s70, %s71
      %p83 = scmp.eq.s32.totalorder %s17, 1
      %p84 = por %p82, %p83
      %p86 = scmp.ne.s32.totalorder %s71, %s85
      %p87 = scmp.eq.s32.totalorder %s17, 0
      %p88 = por %p86, %p87
      %s89 = ssub.s32 %s18, %s37
      %s90 = ssub.s32 %s19, %s33
      %s91 = sor.u32 %s89, %s90
      %p92 = scmp.eq.s32.totalorder %s91, 0
      %s94 = sadd.s32 %s93, 1
      %s95 = scalar_select %p92, %s93, %s94
      %p98 = pneg %p92
      %p99 = scmp.eq.s32.totalorder %s11, 1
      %p100 = por %p98, %p99
      %p101 = scmp.ne.s32.totalorder %s93, %s96
      %p102 = scmp.eq.s32.totalorder %s11, 0
      %p103 = por %p101, %p102
      %p104 = scmp.ne.s32.totalorder %s93, %s96
      %p105 = scmp.eq.s32.totalorder %s16, 1
      %p106 = por %p104, %p105
      %p107 = scmp.ne.s32.totalorder %s96, %s97
      %p108 = scmp.eq.s32.totalorder %s16, 0
      %p109 = por %p107, %p108
      %p110 = scmp.ne.s32.totalorder %s96, %s97
      %p111 = scmp.eq.s32.totalorder %s17, 1
      %p112 = por %p110, %p111
      %p114 = scmp.ne.s32.totalorder %s97, %s113
      %p115 = scmp.eq.s32.totalorder %s17, 0
      %p116 = por %p114, %p115
      %p117 = scmp.le.s32.totalorder 1, %s11
      %p118 = scmp.lt.s32.totalorder %s11, 3
      %p119 = pnand %p117, %p118
      %p120 = pneg %p119
      // Predicated region
      $region9: #{tpu_custom_call.1} parent=5 // pred_check
        _
      $region10: #{tpu_custom_call.1} parent=5 // pred_check_branch
        %122 = sbr.rel (%p119) target = $region12
      $region11: #{tpu_custom_call.1} parent=5 // pred_region
        %s123 = ssub.s32 %s11, 1
        // Predicated region
        $region13: #{tpu_custom_call.1} parent=11 // pred_check
          %p124 = pneg %p81
        $region14: #{tpu_custom_call.1} parent=11 // pred_check_branch
          %126 = sbr.rel (%p124) target = $region16
        $region15: #{tpu_custom_call.1} parent=11 // pred_region
          _
        $region16: #{tpu_custom_call.1} parent=11 // pred_fallthru
          _
      $region12: #{tpu_custom_call.1} parent=5 // pred_fallthru
        _
      %p127 = scmp.lt.s32.totalorder %s11, 2
      // Predicated region
      $region17: #{tpu_custom_call.1} parent=5 // pred_check
        %p128 = pneg %p127
      $region18: #{tpu_custom_call.1} parent=5 // pred_check_branch
        %130 = sbr.rel (%p128) target = $region20
      $region19: #{tpu_custom_call.1} parent=5 // pred_region
        // Predicated region
        $region21: #{tpu_custom_call.1} parent=19 // pred_check
          %p131 = pneg %p54
        $region22: #{tpu_custom_call.1} parent=19 // pred_check_branch
          %133 = sbr.rel (%p131) target = $region24
        $region23: #{tpu_custom_call.1} parent=19 // pred_region
          %s134 = sadd.s32 %s19, %s20
          %s135 = smul.u32 2, %s134
          %p136 = scmp.lt.s32.totalorder %s18, 1
          %s137 = scalar_select %p136, %s18, 1
          %p138 = scmp.lt.s32.totalorder %s135, 1
          %s139 = scalar_select %p138, %s135, 1
          %s140 = smul.addr %s137, 2
          %s141 = sadd.s32 %s139, %s140
          %s142 = smul.addr %s141, 4
          %s143 = scalar_lea.vmem %s0, %s142
          %s144 = sadd.s32 %s19, %s20
          %s145 = smul.u32 2, %s144
        $region24: #{tpu_custom_call.1} parent=19 // pred_fallthru
          _
      $region20: #{tpu_custom_call.1} parent=5 // pred_fallthru
        _
      %p146 = scmp.le.s32.totalorder 1, %s11
      %p147 = scmp.lt.s32.totalorder %s11, 3
      %p148 = pnand %p146, %p147
      %p149 = pneg %p148
      // Predicated region
      $region25: #{tpu_custom_call.1} parent=5 // pred_check
        _
      $region26: #{tpu_custom_call.1} parent=5 // pred_check_branch
        %151 = sbr.rel (%p148) target = $region28
      $region27: #{tpu_custom_call.1} parent=5 // pred_region
        %s152 = ssub.s32 %s11, 1
        %s153 = sadd.s32 %s22, %s23
        %s154 = smul.u32 2, %s153
        %p155 = scmp.lt.s32.totalorder %s21, 1
        %s156 = scalar_select %p155, %s21, 1
        %p157 = scmp.lt.s32.totalorder %s154, 1
        %s158 = scalar_select %p157, %s154, 1
        %s159 = smul.addr %s156, 2
        %s160 = sadd.s32 %s158, %s159
        %s161 = smul.addr %s160, 4
        %s162 = scalar_lea.vmem %s0, %s161
        %p163 = pneg %p60
        %p164 = pneg %p57
        %p165 = pneg %p81
        %p166 = pneg %p78
        %p167 = pneg %p109
        %p168 = pneg %p106
        %s169 = sand.u32 %s96, 1
        %s170 = scalar_lea.sflag [#allocation4], %s169
        %s171 = sand.u32 %s96, 1
        %s172 = smul.addr %s171, 128
        %s173 = scalar_lea.vmem [#allocation3], %s172
        %s174 = sadd.s32 %s22, %s23
        %s175 = smul.u32 2, %s174
        %p176 = scmp.lt.s32.totalorder %s21, 1
        %s177 = scalar_select %p176, %s21, 1
        %p178 = scmp.lt.s32.totalorder %s175, 1
        %s179 = scalar_select %p178, %s175, 1
        %s180 = smul.addr %s177, 2
        %s181 = sadd.s32 %s179, %s180
        %s182 = smul.addr %s181, 4
        %s183 = scalar_lea.vmem %s0, %s182
        %s184 = sadd.s32 %s22, %s23
        %s185 = smul.u32 2, %s184
        %p187 = scmp.eq.s32.totalorder %s23, 0
        // Predicated region
        $region29: #{tpu_custom_call.1} parent=27 // pred_check
          %p188 = pneg %p187
        $region30: #{tpu_custom_call.1} parent=27 // pred_check_branch
          %190 = sbr.rel (%p188) target = $region32
        $region31: #{tpu_custom_call.1} parent=27 // pred_region
          %191 = vst [vmem:[#allocation2] sm:$0xff] 0.0
          %192 = vst [vmem:[#allocation2 + $0x8] sm:$0xff] 0.0
          %193 = vst [vmem:[#allocation2 + $0x10] sm:$0xff] 0.0
          %194 = vst [vmem:[#allocation2 + $0x18] sm:$0xff] 0.0
          %195 = vst [vmem:[#allocation2 + $0x20] sm:$0xff] 0.0
          %196 = vst [vmem:[#allocation2 + $0x28] sm:$0xff] 0.0
          %197 = vst [vmem:[#allocation2 + $0x30] sm:$0xff] 0.0
          %198 = vst [vmem:[#allocation2 + $0x38] sm:$0xff] 0.0
          %199 = vst [vmem:[#allocation2 + $0x40] sm:$0xff] 0.0
          %200 = vst [vmem:[#allocation2 + $0x48] sm:$0xff] 0.0
          %201 = vst [vmem:[#allocation2 + $0x50] sm:$0xff] 0.0
          %202 = vst [vmem:[#allocation2 + $0x58] sm:$0xff] 0.0
          %203 = vst [vmem:[#allocation2 + $0x60] sm:$0xff] 0.0
          %204 = vst [vmem:[#allocation2 + $0x68] sm:$0xff] 0.0
          %205 = vst [vmem:[#allocation2 + $0x70] sm:$0xff] 0.0
          %206 = vst [vmem:[#allocation2 + $0x78] sm:$0xff] 0.0
        $region32: #{tpu_custom_call.1} parent=27 // pred_fallthru
          _
        %v207 = vld [vmem:[%s183] sm:$0x77]
        %s208 = sadd.s32 %s22, %s23
        %v209 = vlaneseq
        %v210 = vand.u32 %v209, 127
        %v211 = vadd.s32 %v210, 128
        %s212 = smul.u32 %s208, 256
        %v213 = vstv %s212
        %v214 = vadd.s32 %v210, %v213
        %v215 = vadd.s32 %v211, %v213
        %vm216 = vcmp.lt.s32.totalorder %v214, 256
        %vm217 = vcmp.lt.s32.totalorder %v215, 256
        %v218 = vmul.f32 %v207, %v207
        %v220 = vrot.slane %v218, 5
        %v221 = vrot.slane %v220, 4
        %v223 = vadd.f32 %v218, %v221
        %v224 = vrot.slane %v218, 6
        %v225 = vrot.slane %v224, 4
        %v227 = vadd.f32 %v223, %v225
        %v228 = vadd.f32 %v227, 1e-06
        %v229 = vrsqrt.pop %v228
        %v230 = vmul.f32 %v228, %v229
        %vm231 = vcmp.eq.f32.partialorder %v228, inf
        %v232 = vsel %vm231, %v228, %v230
        %vm233 = vcmp.eq.f32.partialorder %v228, 0.0
        %v234 = vand.u32 %v228, 2147483648
        %v235 = vsel %vm233, %v234, %v232
        %v237 = vlaneseq
        %v238 = vshrl.u32 %v237, 7
        %v239 = vsub.s32 0, %v238
        %v240 = vrot.slane %v235, %v239
        %v241 = vlaneseq
        %v242 = vshrl.u32 %v241, 7
        %v243 = vsub.s32 4, %v242
        %v244 = vrot.slane %v235, %v243
        %v247 = vsel %vm216, %v240, 0.0
        %v248 = vsel %vm217, %v244, 0.0
        %v249 = vadd.f32 %v207, 1e-06
        %v250 = vlog2.pop %v249
        %v251 = vmul.f32 %v250, 0.6931472
        %v253 = vrot.slane %v251, 5
        %v254 = vrot.slane %v253, 4
        %v256 = vsub.f32 %v251, %v254
        %v257 = vmul.f32 %v256, 50.0
        %v258 = vrot.slane %v251, 6
        %v259 = vrot.slane %v258, 4
        %v261 = vsub.f32 %v251, %v259
        %v262 = vmul.f32 %v261, 50.0
        %v263 = vld [vmem:[%s1] sm:$0xff]
        %v264 = vld [vmem:[%s1 + $0x8] sm:$0xff]
        %v265 = vld [vmem:[%s1 + $0x10] sm:$0xff]
        %v266 = vld [vmem:[%s1 + $0x18] sm:$0xff]
        %v267 = vld [vmem:[%s1 + $0x20] sm:$0xff]
        %v268 = vld [vmem:[%s1 + $0x28] sm:$0xff]
        %v269 = vld [vmem:[%s1 + $0x30] sm:$0xff]
        %v270 = vld [vmem:[%s1 + $0x38] sm:$0xff]
        %v272 = vlaneseq
        %v273 = vshrl.u32 %v272, 7
        %v274 = vsub.s32 0, %v273
        %v275 = vrot.slane %v257, %v274
        %v276 = vlaneseq
        %v277 = vshrl.u32 %v276, 7
        %v278 = vsub.s32 4, %v277
        %v279 = vrot.slane %v257, %v278
        %v282 = vlaneseq
        %v283 = vshrl.u32 %v282, 7
        %v284 = vsub.s32 0, %v283
        %v285 = vrot.slane %v275, %v284
        %v286 = vlaneseq
        %v287 = vshrl.u32 %v286, 7
        %v288 = vsub.s32 0, %v287
        %v289 = vrot.slane %v279, %v288
        %291 = vset.pattern.permute.xlu0 0
        %292 = vperm.xlu0 %291, %v263
        %v293 = vpop.permute.xlu0 %292
        %296 = vset.pattern.permute.xlu0 0
        %297 = vperm.xlu0 %296, %v264
        %v298 = vpop.permute.xlu0 %297
        %301 = vset.pattern.permute.xlu0 0
        %302 = vperm.xlu0 %301, %v265
        %v303 = vpop.permute.xlu0 %302
        %306 = vset.pattern.permute.xlu0 0
        %307 = vperm.xlu0 %306, %v266
        %v308 = vpop.permute.xlu0 %307
        %311 = vset.pattern.permute.xlu0 0
        %312 = vperm.xlu0 %311, %v267
        %v313 = vpop.permute.xlu0 %312
        %316 = vset.pattern.permute.xlu0 0
        %317 = vperm.xlu0 %316, %v268
        %v318 = vpop.permute.xlu0 %317
        %321 = vset.pattern.permute.xlu0 0
        %322 = vperm.xlu0 %321, %v269
        %v323 = vpop.permute.xlu0 %322
        %326 = vset.pattern.permute.xlu0 0
        %327 = vperm.xlu0 %326, %v270
        %v328 = vpop.permute.xlu0 %327
        %v330 = vsub.f32 %v285, %v293
        %v331 = vsub.f32 %v289, %v293
        %v332 = vsub.f32 %v285, %v298
        %v333 = vsub.f32 %v289, %v298
        %v334 = vsub.f32 %v285, %v303
        %v335 = vsub.f32 %v289, %v303
        %v336 = vsub.f32 %v285, %v308
        %v337 = vsub.f32 %v289, %v308
        %v338 = vsub.f32 %v285, %v313
        %v339 = vsub.f32 %v289, %v313
        %v340 = vsub.f32 %v285, %v318
        %v341 = vsub.f32 %v289, %v318
        %v342 = vsub.f32 %v285, %v323
        %v343 = vsub.f32 %v289, %v323
        %v344 = vsub.f32 %v285, %v328
        %v345 = vsub.f32 %v289, %v328
        %v346 = vmul.f32 %v330, %v330
        %v347 = vmul.f32 %v331, %v331
        %v348 = vmul.f32 %v332, %v332
        %v349 = vmul.f32 %v333, %v333
        %v350 = vmul.f32 %v334, %v334
        %v351 = vmul.f32 %v335, %v335
        %v352 = vmul.f32 %v336, %v336
        %v353 = vmul.f32 %v337, %v337
        %v354 = vmul.f32 %v338, %v338
        %v355 = vmul.f32 %v339, %v339
        %v356 = vmul.f32 %v340, %v340
        %v357 = vmul.f32 %v341, %v341
        %v358 = vmul.f32 %v342, %v342
        %v359 = vmul.f32 %v343, %v343
        %v360 = vmul.f32 %v344, %v344
        %v361 = vmul.f32 %v345, %v345
        %v362 = vadd.f32 %v346, 1.0
        %v363 = vadd.f32 %v347, 1.0
        %v364 = vadd.f32 %v348, 1.0
        %v365 = vadd.f32 %v349, 1.0
        %v366 = vadd.f32 %v350, 1.0
        %v367 = vadd.f32 %v351, 1.0
        %v368 = vadd.f32 %v352, 1.0
        %v369 = vadd.f32 %v353, 1.0
        %v370 = vadd.f32 %v354, 1.0
        %v371 = vadd.f32 %v355, 1.0
        %v372 = vadd.f32 %v356, 1.0
        %v373 = vadd.f32 %v357, 1.0
        %v374 = vadd.f32 %v358, 1.0
        %v375 = vadd.f32 %v359, 1.0
        %v376 = vadd.f32 %v360, 1.0
        %v377 = vadd.f32 %v361, 1.0
        %v378 = vrcp.pop %v362
        %v379 = vrcp.pop %v363
        %v380 = vrcp.pop %v364
        %v381 = vrcp.pop %v365
        %v382 = vrcp.pop %v366
        %v383 = vrcp.pop %v367
        %v384 = vrcp.pop %v368
        %v385 = vrcp.pop %v369
        %v386 = vrcp.pop %v370
        %v387 = vrcp.pop %v371
        %v388 = vrcp.pop %v372
        %v389 = vrcp.pop %v373
        %v390 = vrcp.pop %v374
        %v391 = vrcp.pop %v375
        %v392 = vrcp.pop %v376
        %v393 = vrcp.pop %v377
        %v395 = vlaneseq
        %v396 = vshrl.u32 %v395, 7
        %v397 = vsub.s32 0, %v396
        %v398 = vrot.slane %v262, %v397
        %v399 = vlaneseq
        %v400 = vshrl.u32 %v399, 7
        %v401 = vsub.s32 4, %v400
        %v402 = vrot.slane %v262, %v401
        %v405 = vlaneseq
        %v406 = vshrl.u32 %v405, 7
        %v407 = vsub.s32 0, %v406
        %v408 = vrot.slane %v398, %v407
        %v409 = vlaneseq
        %v410 = vshrl.u32 %v409, 7
        %v411 = vsub.s32 0, %v410
        %v412 = vrot.slane %v402, %v411
        %v413 = vsub.f32 %v408, %v293
        %v414 = vsub.f32 %v412, %v293
        %v415 = vsub.f32 %v408, %v298
        %v416 = vsub.f32 %v412, %v298
        %v417 = vsub.f32 %v408, %v303
        %v418 = vsub.f32 %v412, %v303
        %v419 = vsub.f32 %v408, %v308
        %v420 = vsub.f32 %v412, %v308
        %v421 = vsub.f32 %v408, %v313
        %v422 = vsub.f32 %v412, %v313
        %v423 = vsub.f32 %v408, %v318
        %v424 = vsub.f32 %v412, %v318
        %v425 = vsub.f32 %v408, %v323
        %v426 = vsub.f32 %v412, %v323
        %v427 = vsub.f32 %v408, %v328
        %v428 = vsub.f32 %v412, %v328
        %v429 = vmul.f32 %v413, %v413
        %v430 = vmul.f32 %v414, %v414
        %v431 = vmul.f32 %v415, %v415
        %v432 = vmul.f32 %v416, %v416
        %v433 = vmul.f32 %v417, %v417
        %v434 = vmul.f32 %v418, %v418
        %v435 = vmul.f32 %v419, %v419
        %v436 = vmul.f32 %v420, %v420
        %v437 = vmul.f32 %v421, %v421
        %v438 = vmul.f32 %v422, %v422
        %v439 = vmul.f32 %v423, %v423
        %v440 = vmul.f32 %v424, %v424
        %v441 = vmul.f32 %v425, %v425
        %v442 = vmul.f32 %v426, %v426
        %v443 = vmul.f32 %v427, %v427
        %v444 = vmul.f32 %v428, %v428
        %v445 = vadd.f32 %v429, 1.0
        %v446 = vadd.f32 %v430, 1.0
        %v447 = vadd.f32 %v431, 1.0
        %v448 = vadd.f32 %v432, 1.0
        %v449 = vadd.f32 %v433, 1.0
        %v450 = vadd.f32 %v434, 1.0
        %v451 = vadd.f32 %v435, 1.0
        %v452 = vadd.f32 %v436, 1.0
        %v453 = vadd.f32 %v437, 1.0
        %v454 = vadd.f32 %v438, 1.0
        %v455 = vadd.f32 %v439, 1.0
        %v456 = vadd.f32 %v440, 1.0
        %v457 = vadd.f32 %v441, 1.0
        %v458 = vadd.f32 %v442, 1.0
        %v459 = vadd.f32 %v443, 1.0
        %v460 = vadd.f32 %v444, 1.0
        %v461 = vrcp.pop %v445
        %v462 = vrcp.pop %v446
        %v463 = vrcp.pop %v447
        %v464 = vrcp.pop %v448
        %v465 = vrcp.pop %v449
        %v466 = vrcp.pop %v450
        %v467 = vrcp.pop %v451
        %v468 = vrcp.pop %v452
        %v469 = vrcp.pop %v453
        %v470 = vrcp.pop %v454
        %v471 = vrcp.pop %v455
        %v472 = vrcp.pop %v456
        %v473 = vrcp.pop %v457
        %v474 = vrcp.pop %v458
        %v475 = vrcp.pop %v459
        %v476 = vrcp.pop %v460
        %v477 = vlaneseq
        %v478 = vshrl.u32 %v477, 7
        %v479 = vsub.s32 1, %v478
        %v480 = vrot.slane %v257, %v479
        %v481 = vlaneseq
        %v482 = vshrl.u32 %v481, 7
        %v483 = vsub.s32 5, %v482
        %v484 = vrot.slane %v257, %v483
        %v487 = vlaneseq
        %v488 = vshrl.u32 %v487, 7
        %v489 = vsub.s32 1, %v488
        %v490 = vrot.slane %v480, %v489
        %v491 = vlaneseq
        %v492 = vshrl.u32 %v491, 7
        %v493 = vsub.s32 1, %v492
        %v494 = vrot.slane %v484, %v493
        %v495 = vsub.f32 %v490, %v293
        %v496 = vsub.f32 %v494, %v293
        %v497 = vsub.f32 %v490, %v298
        %v498 = vsub.f32 %v494, %v298
        %v499 = vsub.f32 %v490, %v303
        %v500 = vsub.f32 %v494, %v303
        %v501 = vsub.f32 %v490, %v308
        %v502 = vsub.f32 %v494, %v308
        %v503 = vsub.f32 %v490, %v313
        %v504 = vsub.f32 %v494, %v313
        %v505 = vsub.f32 %v490, %v318
        %v506 = vsub.f32 %v494, %v318
        %v507 = vsub.f32 %v490, %v323
        %v508 = vsub.f32 %v494, %v323
        %v509 = vsub.f32 %v490, %v328
        %v510 = vsub.f32 %v494, %v328
        %v511 = vmul.f32 %v495, %v495
        %v512 = vmul.f32 %v496, %v496
        %v513 = vmul.f32 %v497, %v497
        %v514 = vmul.f32 %v498, %v498
        %v515 = vmul.f32 %v499, %v499
        %v516 = vmul.f32 %v500, %v500
        %v517 = vmul.f32 %v501, %v501
        %v518 = vmul.f32 %v502, %v502
        %v519 = vmul.f32 %v503, %v503
        %v520 = vmul.f32 %v504, %v504
        %v521 = vmul.f32 %v505, %v505
        %v522 = vmul.f32 %v506, %v506
        %v523 = vmul.f32 %v507, %v507
        %v524 = vmul.f32 %v508, %v508
        %v525 = vmul.f32 %v509, %v509
        %v526 = vmul.f32 %v510, %v510
        %v527 = vadd.f32 %v511, 1.0
        %v528 = vadd.f32 %v512, 1.0
        %v529 = vadd.f32 %v513, 1.0
        %v530 = vadd.f32 %v514, 1.0
        %v531 = vadd.f32 %v515, 1.0
        %v532 = vadd.f32 %v516, 1.0
        %v533 = vadd.f32 %v517, 1.0
        %v534 = vadd.f32 %v518, 1.0
        %v535 = vadd.f32 %v519, 1.0
        %v536 = vadd.f32 %v520, 1.0
        %v537 = vadd.f32 %v521, 1.0
        %v538 = vadd.f32 %v522, 1.0
        %v539 = vadd.f32 %v523, 1.0
        %v540 = vadd.f32 %v524, 1.0
        %v541 = vadd.f32 %v525, 1.0
        %v542 = vadd.f32 %v526, 1.0
        %v543 = vrcp.pop %v527
        %v544 = vrcp.pop %v528
        %v545 = vrcp.pop %v529
        %v546 = vrcp.pop %v530
        %v547 = vrcp.pop %v531
        %v548 = vrcp.pop %v532
        %v549 = vrcp.pop %v533
        %v550 = vrcp.pop %v534
        %v551 = vrcp.pop %v535
        %v552 = vrcp.pop %v536
        %v553 = vrcp.pop %v537
        %v554 = vrcp.pop %v538
        %v555 = vrcp.pop %v539
        %v556 = vrcp.pop %v540
        %v557 = vrcp.pop %v541
        %v558 = vrcp.pop %v542
        %v559 = vlaneseq
        %v560 = vshrl.u32 %v559, 7
        %v561 = vsub.s32 0, %v560
        %v562 = vrot.slane %v247, %v561
        %v563 = vlaneseq
        %v564 = vshrl.u32 %v563, 7
        %v565 = vsub.s32 0, %v564
        %v566 = vrot.slane %v248, %v565
        %v567 = vmul.f32 %v562, %v378
        %v568 = vmul.f32 %v566, %v379
        %v569 = vmul.f32 %v562, %v380
        %v570 = vmul.f32 %v566, %v381
        %v571 = vmul.f32 %v562, %v382
        %v572 = vmul.f32 %v566, %v383
        %v573 = vmul.f32 %v562, %v384
        %v574 = vmul.f32 %v566, %v385
        %v575 = vmul.f32 %v562, %v386
        %v576 = vmul.f32 %v566, %v387
        %v577 = vmul.f32 %v562, %v388
        %v578 = vmul.f32 %v566, %v389
        %v579 = vmul.f32 %v562, %v390
        %v580 = vmul.f32 %v566, %v391
        %v581 = vmul.f32 %v562, %v392
        %v582 = vmul.f32 %v566, %v393
        %v583 = vmul.f32 %v562, %v461
        %v584 = vmul.f32 %v566, %v462
        %v585 = vmul.f32 %v562, %v463
        %v586 = vmul.f32 %v566, %v464
        %v587 = vmul.f32 %v562, %v465
        %v588 = vmul.f32 %v566, %v466
        %v589 = vmul.f32 %v562, %v467
        %v590 = vmul.f32 %v566, %v468
        %v591 = vmul.f32 %v562, %v469
        %v592 = vmul.f32 %v566, %v470
        %v593 = vmul.f32 %v562, %v471
        %v594 = vmul.f32 %v566, %v472
        %v595 = vmul.f32 %v562, %v473
        %v596 = vmul.f32 %v566, %v474
        %v597 = vmul.f32 %v562, %v475
        %v598 = vmul.f32 %v566, %v476
        %v599 = vpack.c.bf16 %v569, %v567
        %v600 = vpack.c.bf16 %v570, %v568
        %v601 = vpack.c.bf16 %v573, %v571
        %v602 = vpack.c.bf16 %v574, %v572
        %v603 = vpack.c.bf16 %v577, %v575
        %v604 = vpack.c.bf16 %v578, %v576
        %v605 = vpack.c.bf16 %v581, %v579
        %v606 = vpack.c.bf16 %v582, %v580
        %v607 = vpack.c.bf16 %v585, %v583
        %v608 = vpack.c.bf16 %v586, %v584
        %v609 = vpack.c.bf16 %v589, %v587
        %v610 = vpack.c.bf16 %v590, %v588
        %v611 = vpack.c.bf16 %v593, %v591
        %v612 = vpack.c.bf16 %v594, %v592
        %v613 = vpack.c.bf16 %v597, %v595
        %v614 = vpack.c.bf16 %v598, %v596
        %v615 = vpack.c.bf16 %v463, %v461
        %v616 = vpack.c.bf16 %v464, %v462
        %v617 = vpack.c.bf16 %v467, %v465
        %v618 = vpack.c.bf16 %v468, %v466
        %v619 = vpack.c.bf16 %v471, %v469
        %v620 = vpack.c.bf16 %v472, %v470
        %v621 = vpack.c.bf16 %v475, %v473
        %v622 = vpack.c.bf16 %v476, %v474
        %v623 = vpack.c.bf16 %v545, %v543
        %v624 = vpack.c.bf16 %v546, %v544
        %v625 = vpack.c.bf16 %v549, %v547
        %v626 = vpack.c.bf16 %v550, %v548
        %v627 = vpack.c.bf16 %v553, %v551
        %v628 = vpack.c.bf16 %v554, %v552
        %v629 = vpack.c.bf16 %v557, %v555
        %v630 = vpack.c.bf16 %v558, %v556
        %v631 = vld [vmem:[#allocation2] sm:$0xff]
        %v632 = vld [vmem:[#allocation2 + $0x8] sm:$0xff]
        %v633 = vld [vmem:[#allocation2 + $0x10] sm:$0xff]
        %v634 = vld [vmem:[#allocation2 + $0x18] sm:$0xff]
        %v635 = vld [vmem:[#allocation2 + $0x20] sm:$0xff]
        %v636 = vld [vmem:[#allocation2 + $0x28] sm:$0xff]
        %v637 = vld [vmem:[#allocation2 + $0x30] sm:$0xff]
        %v638 = vld [vmem:[#allocation2 + $0x38] sm:$0xff]
        %v639 = vld [vmem:[#allocation2 + $0x40] sm:$0xff]
        %v640 = vld [vmem:[#allocation2 + $0x48] sm:$0xff]
        %v641 = vld [vmem:[#allocation2 + $0x50] sm:$0xff]
        %v642 = vld [vmem:[#allocation2 + $0x58] sm:$0xff]
        %v643 = vld [vmem:[#allocation2 + $0x60] sm:$0xff]
        %v644 = vld [vmem:[#allocation2 + $0x68] sm:$0xff]
        %v645 = vld [vmem:[#allocation2 + $0x70] sm:$0xff]
        %v646 = vld [vmem:[#allocation2 + $0x78] sm:$0xff]
        %647 = vmatprep.subr.bf16.mxu0 %v616
        %648 = vmatpush1.bf16.xpose.msra.mxu0 %v615
        %649 = vmatprep.subr.bf16.mxu0 %v618
        %650 = vmatpush1.bf16.xpose.msra.mxu0 %v617
        %651 = vmatprep.subr.bf16.mxu0 %v620
        %652 = vmatpush1.bf16.xpose.msra.mxu0 %v619
        %653 = vmatprep.subr.bf16.mxu0 %v622
        %654 = vmatpush1.bf16.xpose.msra.mxu0 %v621
        %655 = vmatprep.subr.bf16.mxu0 %v624
        %656 = vmatpush1.bf16.xpose.msra.mxu0 %v623
        %657 = vmatprep.subr.bf16.mxu0 %v626
        %658 = vmatpush1.bf16.xpose.msra.mxu0 %v625
        %659 = vmatprep.subr.bf16.mxu0 %v628
        %660 = vmatpush1.bf16.xpose.msra.mxu0 %v627
        %661 = vmatprep.subr.bf16.mxu0 %v630
        %662 = vmatpush1.bf16.xpose.msra.mxu0 %v629
        %663 = vmatprep.subr.bf16.mxu0 0
        %664 = vmatpush1.bf16.xpose.msra.mxu0 0
        %665 = vmatprep.subr.bf16.mxu0 0
        %666 = vmatpush1.bf16.xpose.msra.mxu0 0
        %667 = vmatprep.subr.bf16.mxu0 0
        %668 = vmatpush1.bf16.xpose.msra.mxu0 0
        %669 = vmatprep.subr.bf16.mxu0 0
        %670 = vmatpush1.bf16.xpose.msra.mxu0 0
        %671 = vmatprep.subr.bf16.mxu0 0
        %672 = vmatpush1.bf16.xpose.msra.mxu0 0
        %673 = vmatprep.subr.bf16.mxu0 0
        %674 = vmatpush1.bf16.xpose.msra.mxu0 0
        %675 = vmatprep.subr.bf16.mxu0 0
        %676 = vmatpush1.bf16.xpose.msra.mxu0 0
        %677 = vmatprep.subr.bf16.mxu0 0
        %678 = vmatpush1.bf16.xpose.msra.mxu0 0
        %679 = vmatprep.mubr.bf16.mxu0 %v600
        %680 = vmatmul.mubr.bf16.gmra.mrb[0].mxu0 %v599
        %v681 = vpop.f32.mrb[0].mxu0
        %v682 = vadd.f32 0.0, %v681
        %v683 = vpop.f32.mrb[0].mxu0
        %v684 = vpop.f32.mrb[0].mxu0
        %v685 = vadd.f32 0.0, %v684
        %v686 = vpop.f32.mrb[0].mxu0
        %687 = vmatprep.mubr.bf16.mxu0 %v602
        %688 = vmatmul.mubr.bf16.gmra.mrb[0].mxu0 %v601
        %v689 = vpop.f32.mrb[0].mxu0
        %v690 = vadd.f32 0.0, %v689
        %v691 = vpop.f32.mrb[0].mxu0
        %v692 = vpop.f32.mrb[0].mxu0
        %v693 = vadd.f32 0.0, %v692
        %v694 = vpop.f32.mrb[0].mxu0
        %695 = vmatprep.mubr.bf16.mxu0 %v604
        %696 = vmatmul.mubr.bf16.gmra.mrb[0].mxu0 %v603
        %v697 = vpop.f32.mrb[0].mxu0
        %v698 = vadd.f32 0.0, %v697
        %v699 = vpop.f32.mrb[0].mxu0
        %v700 = vpop.f32.mrb[0].mxu0
        %v701 = vadd.f32 0.0, %v700
        %v702 = vpop.f32.mrb[0].mxu0
        %703 = vmatprep.mubr.bf16.mxu0 %v606
        %704 = vmatmul.mubr.bf16.gmra.mrb[0].mxu0 %v605
        %v705 = vpop.f32.mrb[0].mxu0
        %v706 = vadd.f32 0.0, %v705
        %v707 = vpop.f32.mrb[0].mxu0
        %v708 = vpop.f32.mrb[0].mxu0
        %v709 = vadd.f32 0.0, %v708
        %v710 = vpop.f32.mrb[0].mxu0
        %711 = vmatprep.mubr.bf16.mxu0 %v608
        %712 = vmatmul.mubr.bf16.gmra.mrb[0].mxu0 %v607
        %v713 = vpop.f32.mrb[0].mxu0
        %v714 = vadd.f32 0.0, %v713
        %v715 = vpop.f32.mrb[0].mxu0
        %v716 = vpop.f32.mrb[0].mxu0
        %v717 = vadd.f32 0.0, %v716
        %v718 = vpop.f32.mrb[0].mxu0
        %719 = vmatprep.mubr.bf16.mxu0 %v610
        %720 = vmatmul.mubr.bf16.gmra.mrb[0].mxu0 %v609
        %v721 = vpop.f32.mrb[0].mxu0
        %v722 = vadd.f32 0.0, %v721
        %v723 = vpop.f32.mrb[0].mxu0
        %v724 = vpop.f32.mrb[0].mxu0
        %v725 = vadd.f32 0.0, %v724
        %v726 = vpop.f32.mrb[0].mxu0
        %727 = vmatprep.mubr.bf16.mxu0 %v612
        %728 = vmatmul.mubr.bf16.gmra.mrb[0].mxu0 %v611
        %v729 = vpop.f32.mrb[0].mxu0
        %v730 = vadd.f32 0.0, %v729
        %v731 = vpop.f32.mrb[0].mxu0
        %v732 = vpop.f32.mrb[0].mxu0
        %v733 = vadd.f32 0.0, %v732
        %v734 = vpop.f32.mrb[0].mxu0
        %735 = vmatprep.mubr.bf16.mxu0 %v614
        %736 = vmatmul.mubr.bf16.gmra.mrb[0].mxu0 %v613
        %v737 = vpop.f32.mrb[0].mxu0
        %v738 = vadd.f32 0.0, %v737
        %v739 = vpop.f32.mrb[0].mxu0
        %v740 = vpop.f32.mrb[0].mxu0
        %v741 = vadd.f32 0.0, %v740
        %v742 = vpop.f32.mrb[0].mxu0
        %743 = vdwg.mxu0
        %v744 = vadd.f32 %v631, %v682
        %v745 = vadd.f32 %v632, %v685
        %v746 = vadd.f32 %v633, %v690
        %v747 = vadd.f32 %v634, %v693
        %v748 = vadd.f32 %v635, %v698
        %v749 = vadd.f32 %v636, %v701
        %v750 = vadd.f32 %v637, %v706
        %v751 = vadd.f32 %v638, %v709
        %v752 = vadd.f32 %v639, %v714
        %v753 = vadd.f32 %v640, %v717
        %v754 = vadd.f32 %v641, %v722
        %v755 = vadd.f32 %v642, %v725
        %v756 = vadd.f32 %v643, %v730
        %v757 = vadd.f32 %v644, %v733
        %v758 = vadd.f32 %v645, %v738
        %v759 = vadd.f32 %v646, %v741
        %760 = vst [vmem:[#allocation2] sm:$0xff] %v744
        %761 = vst [vmem:[#allocation2 + $0x8] sm:$0xff] %v745
        %762 = vst [vmem:[#allocation2 + $0x10] sm:$0xff] %v746
        %763 = vst [vmem:[#allocation2 + $0x18] sm:$0xff] %v747
        %764 = vst [vmem:[#allocation2 + $0x20] sm:$0xff] %v748
        %765 = vst [vmem:[#allocation2 + $0x28] sm:$0xff] %v749
        %766 = vst [vmem:[#allocation2 + $0x30] sm:$0xff] %v750
        %767 = vst [vmem:[#allocation2 + $0x38] sm:$0xff] %v751
        %768 = vst [vmem:[#allocation2 + $0x40] sm:$0xff] %v752
        %769 = vst [vmem:[#allocation2 + $0x48] sm:$0xff] %v753
        %770 = vst [vmem:[#allocation2 + $0x50] sm:$0xff] %v754
        %771 = vst [vmem:[#allocation2 + $0x58] sm:$0xff] %v755
        %772 = vst [vmem:[#allocation2 + $0x60] sm:$0xff] %v756
        %773 = vst [vmem:[#allocation2 + $0x68] sm:$0xff] %v757
        %774 = vst [vmem:[#allocation2 + $0x70] sm:$0xff] %v758
        %775 = vst [vmem:[#allocation2 + $0x78] sm:$0xff] %v759
        // Predicated region
        $region33: #{tpu_custom_call.1} parent=27 // pred_check
          %p776 = pneg %p187
        $region34: #{tpu_custom_call.1} parent=27 // pred_check_branch
          %778 = sbr.rel (%p776) target = $region36
        $region35: #{tpu_custom_call.1} parent=27 // pred_region
          %v779 = vld [vmem:[#allocation2] sm:$0xff]
          %v780 = vld [vmem:[#allocation2 + $0x8] sm:$0xff]
          %v781 = vld [vmem:[#allocation2 + $0x10] sm:$0xff]
          %v782 = vld [vmem:[#allocation2 + $0x18] sm:$0xff]
          %v783 = vld [vmem:[#allocation2 + $0x20] sm:$0xff]
          %v784 = vld [vmem:[#allocation2 + $0x28] sm:$0xff]
          %v785 = vld [vmem:[#allocation2 + $0x30] sm:$0xff]
          %v786 = vld [vmem:[#allocation2 + $0x38] sm:$0xff]
          %v787 = vld [vmem:[#allocation2 + $0x40] sm:$0xff]
          %v788 = vld [vmem:[#allocation2 + $0x48] sm:$0xff]
          %v789 = vld [vmem:[#allocation2 + $0x50] sm:$0xff]
          %v790 = vld [vmem:[#allocation2 + $0x58] sm:$0xff]
          %v791 = vld [vmem:[#allocation2 + $0x60] sm:$0xff]
          %v792 = vld [vmem:[#allocation2 + $0x68] sm:$0xff]
          %v793 = vld [vmem:[#allocation2 + $0x70] sm:$0xff]
          %v794 = vld [vmem:[#allocation2 + $0x78] sm:$0xff]
          %795 = vst [vmem:[%s173] sm:$0xff] %v779
          %796 = vst [vmem:[%s173 + $0x8] sm:$0xff] %v780
          %797 = vst [vmem:[%s173 + $0x10] sm:$0xff] %v781
          %798 = vst [vmem:[%s173 + $0x18] sm:$0xff] %v782
          %799 = vst [vmem:[%s173 + $0x20] sm:$0xff] %v783
          %800 = vst [vmem:[%s173 + $0x28] sm:$0xff] %v784
          %801 = vst [vmem:[%s173 + $0x30] sm:$0xff] %v785
          %802 = vst [vmem:[%s173 + $0x38] sm:$0xff] %v786
          %803 = vst [vmem:[%s173 + $0x40] sm:$0xff] %v787
          %804 = vst [vmem:[%s173 + $0x48] sm:$0xff] %v788
          %805 = vst [vmem:[%s173 + $0x50] sm:$0xff] %v789
          %806 = vst [vmem:[%s173 + $0x58] sm:$0xff] %v790
          %807 = vst [vmem:[%s173 + $0x60] sm:$0xff] %v791
          %808 = vst [vmem:[%s173 + $0x68] sm:$0xff] %v792
          %809 = vst [vmem:[%s173 + $0x70] sm:$0xff] %v793
          %810 = vst [vmem:[%s173 + $0x78] sm:$0xff] %v794
        $region36: #{tpu_custom_call.1} parent=27 // pred_fallthru
          _
        %s811 = sand.u32 %s96, 1
        %s812 = scalar_lea.sflag [#allocation4], %s811
        %s813 = sand.u32 %s96, 1
        %s814 = smul.addr %s813, 128
        %s815 = scalar_lea.vmem [#allocation3], %s814
        // Predicated region
        $region37: #{tpu_custom_call.1} parent=27 // pred_check
          %p816 = pneg %p106
        $region38: #{tpu_custom_call.1} parent=27 // pred_check_branch
          %818 = sbr.rel (%p816) target = $region40
        $region39: #{tpu_custom_call.1} parent=27 // pred_region
          %s820 = ssub.s32 2048, 2048
          %821 = vsyncadd %s812, %s820
          %s822 = smul.addr %s22, 16
          %s823 = smul.addr %s21, 16
          %s824 = sadd.s32 %s822, %s823
          %s825 = smul.addr %s824, 128
          %s826 = scalar_lea.hbm %s2, %s825
          %s827 = sshll.u32 %s815, 4
          %s828 = int_to_ptr.vmem [resolvable:$true] %s827
          %833 = dma.vmem_to_hbm [thread:$0]  %s828, 2048, %s826, %s812, 128, 128, 8
        $region40: #{tpu_custom_call.1} parent=27 // pred_fallthru
          _
      $region28: #{tpu_custom_call.1} parent=5 // pred_fallthru
        _
      %p834 = scmp.le.s32.totalorder 2, %s11
      // Predicated region
      $region41: #{tpu_custom_call.1} parent=5 // pred_check
        %p835 = pneg %p834
      $region42: #{tpu_custom_call.1} parent=5 // pred_check_branch
        %837 = sbr.rel (%p835) target = $region44
      $region43: #{tpu_custom_call.1} parent=5 // pred_region
        %s838 = ssub.s32 %s11, 2
        // Predicated region
        $region45: #{tpu_custom_call.1} parent=43 // pred_check
          %p839 = pneg %p112
        $region46: #{tpu_custom_call.1} parent=43 // pred_check_branch
          %841 = sbr.rel (%p839) target = $region48
        $region47: #{tpu_custom_call.1} parent=43 // pred_region
          %s842 = sand.u32 %s97, 1
          %s843 = scalar_lea.sflag [#allocation4], %s842
          %s844 = sand.u32 %s97, 1
          %s845 = smul.addr %s844, 128
          %s846 = scalar_lea.vmem [#allocation3], %s845
          %847 = dma.done %s843, 2048
        $region48: #{tpu_custom_call.1} parent=43 // pred_fallthru
          _
      $region44: #{tpu_custom_call.1} parent=5 // pred_fallthru
        _
    $region6: #{tpu_custom_call.1} parent=1 // loop_footer
      %s15 = sadd.s32 1, %s11
    $region7: #{tpu_custom_call.1} parent=1 // loop_footer_branch
      %10 = sbr.rel target = $region3
    $region8: #{tpu_custom_call.1} parent=1 // loop_exit
      _
    %848 = vsyncpa [#allocation4], 1
    %s849 = scalar_lea.sflag [#allocation4], 1
    %850 = vsyncpa %s849, 1

</llo_original>
